<compile_context>
chip_gen: v7x
topology: tpu7x:2x2x1
jax: 0.10.0
libtpu: 0.0.40
codegen_flags: <defaults>
</compile_context>

<pallas_src>
import functools

import jax
import jax.numpy as jnp
from jax.experimental import pallas as pl
from jax.experimental.pallas import tpu as pltpu

NEG_SLOPE = 0.01   # torch.nn.LeakyReLU default negative_slope
LN_EPS = 1e-5      # torch.nn.LayerNorm default eps
LANE = 128


# ---------------------------------------------------------------------------
# Fused Pallas kernel: linear1 -> LeakyReLU -> LayerNorm -> (dropout=id) -> linear2
# Weights arrive pre-transposed + zero-padded to lane-dense widths:
#   w1t (in_dim, hidden_pad), ln_params (3, hidden_pad) = [b1; gamma; beta],
#   w2t (hidden_pad, out_pad), b2 (1, out_pad).
# `hidden` is the TRUE (unpadded) hidden width, used for LN statistics.
# ---------------------------------------------------------------------------
def graph_mlp_kernel(x_ref, w1t_ref, ln_ref, w2t_ref, b2_ref, o_ref, *, hidden):
    ln = ln_ref[...]                      # (3, hidden_pad), f32
    b1 = ln[0:1, :]
    gamma = ln[1:2, :]
    beta = ln[2:3, :]

    # linear1 (MXU, bf16 inputs, f32 accumulate).  Padded hidden lanes get 0 + 0 bias.
    h = jnp.dot(x_ref[...], w1t_ref[...], preferred_element_type=jnp.float32) + b1

    # LeakyReLU (VPU) — max form, no compare+select.  LeakyReLU(0)=0 keeps pad lanes 0.
    h = jnp.maximum(h, NEG_SLOPE * h)

    # LayerNorm over the feature (lane) axis, stats in f32.
    # Padded lanes are zero -> sums over the padded width equal sums over `hidden`;
    # divide by the TRUE hidden width.  var = E[h^2] - mu^2.
    inv_h = 1.0 / float(hidden)
    s1 = jnp.sum(h, axis=-1, keepdims=True)
    s2 = jnp.sum(h * h, axis=-1, keepdims=True)
    mu = s1 * inv_h
    var = s2 * inv_h - mu * mu
    # Padded lanes become (0 - mu)*rsqrt(...) but gamma/beta are zero there -> 0.
    h = (h - mu) * jax.lax.rsqrt(var + LN_EPS) * gamma + beta

    # dropout(p) is identity for the forward math here (inference semantics).

    # linear2 (MXU, bf16 inputs, f32 accumulate); padded w2t rows/cols and b2 are 0.
    o_ref[...] = (
        jnp.dot(h.astype(jnp.bfloat16), w2t_ref[...],
                preferred_element_type=jnp.float32)
        + b2_ref[...]
    )


# ---------------------------------------------------------------------------
# Wrapper: layout plumbing (transpose, zero-pad to lane width, stack LN params,
# bf16 casts for MXU inputs) + a single fused pallas_call.
# ---------------------------------------------------------------------------
def _round_up(v, m):
    return ((v + m - 1) // m) * m


def _pad_to(a, axis, target):
    pad = target - a.shape[axis]
    if pad <= 0:
        return a
    widths = [(0, 0)] * a.ndim
    widths[axis] = (0, pad)
    return jnp.pad(a, widths)


def _pick_block_rows(n):
    # Prefer large row tiles (big DMAs, few grid steps); fall back to full array.
    for tm in (1024, 512, 256, 128, 64, 32, 16, 8):
        if n % tm == 0:
            return tm
    return n   # full-extent block is always legal


def pallas_graph_mlp(x, w1, b1, gamma, beta, w2, b2, *, block_rows=None):
    n, in_dim = x.shape
    hidden = w1.shape[0]
    out_dim = w2.shape[0]
    hidden_pad = _round_up(hidden, LANE)
    out_pad = _round_up(out_dim, LANE)

    # One-time layout plumbing outside the kernel (no in-kernel transposes).
    w1t = _pad_to(jnp.asarray(w1, jnp.float32).T, 1, hidden_pad)          # (in, Hp)
    w2t = _pad_to(_pad_to(jnp.asarray(w2, jnp.float32).T, 0, hidden_pad), # (Hp, Op)
                  1, out_pad)
    ln_params = jnp.stack([                                                # (3, Hp)
        _pad_to(jnp.asarray(b1, jnp.float32), 0, hidden_pad),
        _pad_to(jnp.asarray(gamma, jnp.float32), 0, hidden_pad),
        _pad_to(jnp.asarray(beta, jnp.float32), 0, hidden_pad),
    ])
    b2r = _pad_to(jnp.asarray(b2, jnp.float32), 0, out_pad).reshape(1, out_pad)

    # bf16 MXU inputs; accumulation + epilogue stay f32 inside the kernel.
    x_bf = jnp.asarray(x, jnp.float32).astype(jnp.bfloat16)
    w1t_bf = w1t.astype(jnp.bfloat16)
    w2t_bf = w2t.astype(jnp.bfloat16)

    tm = block_rows if block_rows is not None else _pick_block_rows(n)
    if n % tm != 0:
        tm = n
    grid = (n // tm,)

    kernel = functools.partial(graph_mlp_kernel, hidden=hidden)

    y_pad = pl.pallas_call(
        kernel,
        out_shape=jax.ShapeDtypeStruct((n, out_pad), jnp.float32),
        grid=grid,
        in_specs=[
            pl.BlockSpec((tm, in_dim), lambda i: (i, 0)),          # x: tiled over rows
            pl.BlockSpec((in_dim, hidden_pad), lambda i: (0, 0)),  # w1t: VMEM-resident
            pl.BlockSpec((3, hidden_pad), lambda i: (0, 0)),       # [b1; gamma; beta]
            pl.BlockSpec((hidden_pad, out_pad), lambda i: (0, 0)), # w2t: VMEM-resident
            pl.BlockSpec((1, out_pad), lambda i: (0, 0)),          # b2
        ],
        out_specs=pl.BlockSpec((tm, out_pad), lambda i: (i, 0)),   # lane-dense stores
        compiler_params=pltpu.CompilerParams(
            dimension_semantics=("parallel",),      # independent row tiles
            vmem_limit_bytes=32 * 1024 * 1024,      # explicit budget; safe on v5e/v6e/v7x
        ),
    )(x_bf, w1t_bf, ln_params, w2t_bf, b2r)

    # Strip the lane padding (cheap XLA slice outside the kernel).
    return y_pad[:, :out_dim] if out_pad != out_dim else y_pad


# ---------------------------------------------------------------------------
# Pure-JAX reference (same math as the PyTorch module) for verification
# ---------------------------------------------------------------------------
def ref_graph_mlp(x, w1, b1, gamma, beta, w2, b2):
    h = x @ w1.T + b1
    h = jnp.where(h >= 0, h, NEG_SLOPE * h)
    mu = jnp.mean(h, axis=-1, keepdims=True)
    var = jnp.mean((h - mu) ** 2, axis=-1, keepdims=True)
    h = (h - mu) / jnp.sqrt(var + LN_EPS) * gamma + beta
    return h @ w2.T + b2


# ---------------------------------------------------------------------------
# Deterministic parameter construction (PyTorch Linear / LayerNorm defaults)
# ---------------------------------------------------------------------------
def _linear_init(key, out_d, in_d):
    bound = 1.0 / (in_d ** 0.5)
    kw, kb = jax.random.split(key)
    w = jax.random.uniform(kw, (out_d, in_d), jnp.float32, -bound, bound)
    b = jax.random.uniform(kb, (out_d,), jnp.float32, -bound, bound)
    return w, b


def init_graph_mlp_params(key, in_dim, hidden_dim, out_dim):
    k1, k2 = jax.random.split(key)
    w1, b1 = _linear_init(k1, hidden_dim, in_dim)
    w2, b2 = _linear_init(k2, out_dim, hidden_dim)
    gamma = jnp.ones((hidden_dim,), jnp.float32)
    beta = jnp.zeros((hidden_dim,), jnp.float32)
    return dict(w1=w1, b1=b1, gamma=gamma, beta=beta, w2=w2, b2=b2)


# ---------------------------------------------------------------------------
if __name__ == "__main__":
    # GraphMLP operates on node features [num_nodes, in_dim].
    num_nodes, in_dim, hidden_dim, out_dim = 64, 8, 32, 32
    dropout = 0.0                      # eval / p irrelevant to forward math here
    normalize_input = True             # created but unused by forward (see module)

    key = jax.random.PRNGKey(0)
    kx, kp = jax.random.split(key)
    x = jax.random.normal(kx, (num_nodes, in_dim), jnp.float32)
    p = init_graph_mlp_params(kp, in_dim, hidden_dim, out_dim)

    run = jax.jit(pallas_graph_mlp)   # block_rows auto -> tm=64, grid=(1,)
    y = run(x, p["w1"], p["b1"], p["gamma"], p["beta"], p["w2"], p["b2"])
    y = jax.block_until_ready(y)

    y_ref = ref_graph_mlp(x, p["w1"], p["b1"], p["gamma"], p["beta"], p["w2"], p["b2"])

    assert y.shape == (num_nodes, out_dim)
    max_err = float(jnp.max(jnp.abs(y - y_ref)))
    # Tolerance sized for bf16 MXU inputs (epilogue and accumulation are f32).
    assert jnp.allclose(y, y_ref, atol=2e-2, rtol=2e-2), (
        f"mismatch: max abs err {max_err}")

    print("KERNEL_OK")
</pallas_src>

<mosaic_0001>
module attributes {stable_mosaic.version = 11 : i64} {
  func.func @graph_mlp_kernel(%arg0: i32, %arg1: memref<64x8xbf16, #tpu.memory_space<vmem>>, %arg2: memref<8x128xbf16, #tpu.memory_space<vmem>>, %arg3: memref<3x128xf32, #tpu.memory_space<vmem>>, %arg4: memref<128x128xbf16, #tpu.memory_space<vmem>>, %arg5: memref<1x128xf32, #tpu.memory_space<vmem>>, %arg6: memref<64x128xf32, #tpu.memory_space<vmem>>) attributes {dimension_semantics = [#tpu.dimension_semantics<parallel>], iteration_bounds = array<i64: 1>, scalar_prefetch = 0 : i64, scratch_operands = 0 : i64, tpu.core_type = #tpu.core_type<tc>, window_params = [{transform_indices = @transform_0, window_bounds = array<i64: 64, 8>}, {pipeline_mode = #tpu.pipeline_mode<synchronous>, transform_indices = @transform_1, window_bounds = array<i64: 8, 128>}, {pipeline_mode = #tpu.pipeline_mode<synchronous>, transform_indices = @transform_2, window_bounds = array<i64: 3, 128>}, {pipeline_mode = #tpu.pipeline_mode<synchronous>, transform_indices = @transform_3, window_bounds = array<i64: 128, 128>}, {pipeline_mode = #tpu.pipeline_mode<synchronous>, transform_indices = @transform_4, window_bounds = array<i64: 1, 128>}, {transform_indices = @transform_5, window_bounds = array<i64: 64, 128>}]} {
    %c0 = arith.constant 0 : index
    %c0_0 = arith.constant 0 : index
    %0 = vector.load %arg3[%c0, %c0_0] : memref<3x128xf32, #tpu.memory_space<vmem>>, vector<3x128xf32>
    %1 = vector.extract_strided_slice %0 {offsets = [0, 0], sizes = [1, 128], strides = [1, 1]} : vector<3x128xf32> to vector<1x128xf32>
    %2 = vector.extract_strided_slice %0 {offsets = [1, 0], sizes = [1, 128], strides = [1, 1]} : vector<3x128xf32> to vector<1x128xf32>
    %3 = vector.extract_strided_slice %0 {offsets = [2, 0], sizes = [1, 128], strides = [1, 1]} : vector<3x128xf32> to vector<1x128xf32>
    %c0_1 = arith.constant 0 : index
    %c0_2 = arith.constant 0 : index
    %4 = vector.load %arg1[%c0_1, %c0_2] : memref<64x8xbf16, #tpu.memory_space<vmem>>, vector<64x8xbf16>
    %c0_3 = arith.constant 0 : index
    %c0_4 = arith.constant 0 : index
    %5 = vector.load %arg2[%c0_3, %c0_4] : memref<8x128xbf16, #tpu.memory_space<vmem>>, vector<8x128xbf16>
    %cst = arith.constant dense<0.000000e+00> : vector<64x128xf32>
    %6 = tpu.matmul %4, %5, %cst {dimension_numbers = #tpu.dot_dimension_numbers<[1], [0], [0], [1], [0, 0, 1, 1], [], []>} : vector<64x8xbf16>, vector<8x128xbf16>, vector<64x128xf32> -> vector<64x128xf32>
    %7 = vector.broadcast %1 : vector<1x128xf32> to vector<64x128xf32>
    %8 = arith.addf %6, %7 : vector<64x128xf32>
    %cst_5 = arith.constant 0.00999999977 : f32
    %9 = vector.broadcast %cst_5 : f32 to vector<64x128xf32>
    %10 = arith.mulf %9, %8 : vector<64x128xf32>
    %11 = arith.maximumf %8, %10 : vector<64x128xf32>
    %cst_6 = arith.constant dense<0.000000e+00> : vector<64xf32>
    %12 = vector.multi_reduction <add>, %11, %cst_6 [1] : vector<64x128xf32> to vector<64xf32>
    %13 = vector.shape_cast %12 : vector<64xf32> to vector<64x1xf32>
    %14 = arith.mulf %11, %11 : vector<64x128xf32>
    %cst_7 = arith.constant dense<0.000000e+00> : vector<64xf32>
    %15 = vector.multi_reduction <add>, %14, %cst_7 [1] : vector<64x128xf32> to vector<64xf32>
    %16 = vector.shape_cast %15 : vector<64xf32> to vector<64x1xf32>
    %cst_8 = arith.constant 3.125000e-02 : f32
    %17 = vector.broadcast %cst_8 : f32 to vector<64x1xf32>
    %18 = arith.mulf %13, %17 : vector<64x1xf32>
    %cst_9 = arith.constant 3.125000e-02 : f32
    %19 = vector.broadcast %cst_9 : f32 to vector<64x1xf32>
    %20 = arith.mulf %16, %19 : vector<64x1xf32>
    %21 = arith.mulf %18, %18 : vector<64x1xf32>
    %22 = arith.subf %20, %21 : vector<64x1xf32>
    %23 = vector.broadcast %18 : vector<64x1xf32> to vector<64x128xf32>
    %24 = arith.subf %11, %23 : vector<64x128xf32>
    %cst_10 = arith.constant 9.99999974E-6 : f32
    %25 = vector.broadcast %cst_10 : f32 to vector<64x1xf32>
    %26 = arith.addf %22, %25 : vector<64x1xf32>
    %27 = math.rsqrt %26 : vector<64x1xf32>
    %28 = vector.broadcast %27 : vector<64x1xf32> to vector<64x128xf32>
    %29 = arith.mulf %24, %28 : vector<64x128xf32>
    %30 = vector.broadcast %2 : vector<1x128xf32> to vector<64x128xf32>
    %31 = arith.mulf %29, %30 : vector<64x128xf32>
    %32 = vector.broadcast %3 : vector<1x128xf32> to vector<64x128xf32>
    %33 = arith.addf %31, %32 : vector<64x128xf32>
    %34 = arith.truncf %33 : vector<64x128xf32> to vector<64x128xbf16>
    %c0_11 = arith.constant 0 : index
    %c0_12 = arith.constant 0 : index
    %35 = vector.load %arg4[%c0_11, %c0_12] : memref<128x128xbf16, #tpu.memory_space<vmem>>, vector<128x128xbf16>
    %cst_13 = arith.constant dense<0.000000e+00> : vector<64x128xf32>
    %36 = tpu.matmul %34, %35, %cst_13 {dimension_numbers = #tpu.dot_dimension_numbers<[1], [0], [0], [1], [0, 0, 1, 1], [], []>} : vector<64x128xbf16>, vector<128x128xbf16>, vector<64x128xf32> -> vector<64x128xf32>
    %c0_14 = arith.constant 0 : index
    %c0_15 = arith.constant 0 : index
    %37 = vector.load %arg5[%c0_14, %c0_15] : memref<1x128xf32, #tpu.memory_space<vmem>>, vector<1x128xf32>
    %38 = vector.broadcast %37 : vector<1x128xf32> to vector<64x128xf32>
    %39 = arith.addf %36, %38 : vector<64x128xf32>
    %c0_16 = arith.constant 0 : index
    %c0_17 = arith.constant 0 : index
    %40 = vector.load %arg6[%c0_16, %c0_17] : memref<64x128xf32, #tpu.memory_space<vmem>>, vector<64x128xf32>
    tpu.vector_store %arg6[%c0_16, %c0_17], %39 {strides = array<i32>} : memref<64x128xf32, #tpu.memory_space<vmem>>, vector<64x128xf32>,
    return
  }
  func.func @transform_0(%arg0: i32) -> (i32, i32) {
    %c0_i32 = arith.constant 0 : i32
    %c0_i32_0 = arith.constant 0 : i32
    return %arg0, %c0_i32 : i32, i32
  }
  func.func @transform_1(%arg0: i32) -> (i32, i32) {
    %c0_i32 = arith.constant 0 : i32
    %c0_i32_0 = arith.constant 0 : i32
    %c0_i32_1 = arith.constant 0 : i32
    return %c0_i32, %c0_i32_0 : i32, i32
  }
  func.func @transform_2(%arg0: i32) -> (i32, i32) {
    %c0_i32 = arith.constant 0 : i32
    %c0_i32_0 = arith.constant 0 : i32
    %c0_i32_1 = arith.constant 0 : i32
    return %c0_i32, %c0_i32_0 : i32, i32
  }
  func.func @transform_3(%arg0: i32) -> (i32, i32) {
    %c0_i32 = arith.constant 0 : i32
    %c0_i32_0 = arith.constant 0 : i32
    %c0_i32_1 = arith.constant 0 : i32
    return %c0_i32, %c0_i32_0 : i32, i32
  }
  func.func @transform_4(%arg0: i32) -> (i32, i32) {
    %c0_i32 = arith.constant 0 : i32
    %c0_i32_0 = arith.constant 0 : i32
    %c0_i32_1 = arith.constant 0 : i32
    return %c0_i32, %c0_i32_0 : i32, i32
  }
  func.func @transform_5(%arg0: i32) -> (i32, i32) {
    %c0_i32 = arith.constant 0 : i32
    %c0_i32_0 = arith.constant 0 : i32
    return %arg0, %c0_i32 : i32, i32
  }
}

</mosaic_0001>

<llo_original>
// kernel: pallas_graph_mlp.1
$region0: #{pallas_graph_mlp.1}
  #allocation0 [shape = 'u32[]', space=smem, size = 0x4, offset = 0x4, fixed_abs, tag = 'smem constant byte address 0x4 - core index']
  #allocation1 [shape = 'u32[144,128]{1,0:T(1,128)}', space=vmem, size = 0x12000, scoped, tag = 'internal scratch']
  %s0 = inlined_call_operand.vmem [shape: bf16[64,8], index: 0, kind: input, shape index: {}]
  %s1 = inlined_call_operand.vmem [shape: bf16[8,128], index: 1, kind: input, shape index: {}]
  %s2 = inlined_call_operand.vmem [shape: f32[3,128], index: 2, kind: input, shape index: {}]
  %s3 = inlined_call_operand.vmem [shape: bf16[128,128], index: 3, kind: input, shape index: {}]
  %s4 = inlined_call_operand.vmem [shape: f32[1,128], index: 4, kind: input, shape index: {}]
  %s5 = inlined_call_operand.vmem [shape: f32[64,128], index: 5, kind: output, shape index: {}]
  %s6 = sld [smem:[#allocation0]]
  $region30: #{pallas_graph_mlp.1} parent=0
    _
  %s8 = ssub.s32 1, %s6
  %s9 = scalar_select 0, %s8, %s6
  // Predicated region
  $region2: #{pallas_graph_mlp.1} parent=0 // pred_check
    _
  $region3: #{pallas_graph_mlp.1} parent=0 // pred_check_branch
    %11 = sbr.rel (0) target = $region5
  $region4: #{pallas_graph_mlp.1} parent=0 // pred_region
    _
  $region5: #{pallas_graph_mlp.1} parent=0 // pred_fallthru
    _
  // Predicated region
  $region6: #{pallas_graph_mlp.1} parent=0 // pred_check
    _
  $region7: #{pallas_graph_mlp.1} parent=0 // pred_check_branch
    %13 = sbr.rel (0) target = $region9
  $region8: #{pallas_graph_mlp.1} parent=0 // pred_region
    _
  $region9: #{pallas_graph_mlp.1} parent=0 // pred_fallthru
    _
  // Predicated region
  $region10: #{pallas_graph_mlp.1} parent=0 // pred_check
    _
  $region11: #{pallas_graph_mlp.1} parent=0 // pred_check_branch
    %15 = sbr.rel (0) target = $region13
  $region12: #{pallas_graph_mlp.1} parent=0 // pred_region
    _
  $region13: #{pallas_graph_mlp.1} parent=0 // pred_fallthru
    _
  // Predicated region
  $region14: #{pallas_graph_mlp.1} parent=0 // pred_check
    _
  $region15: #{pallas_graph_mlp.1} parent=0 // pred_check_branch
    %17 = sbr.rel (0) target = $region17
  $region16: #{pallas_graph_mlp.1} parent=0 // pred_region
    _
  $region17: #{pallas_graph_mlp.1} parent=0 // pred_fallthru
    _
  // Predicated region
  $region18: #{pallas_graph_mlp.1} parent=0 // pred_check
    _
  $region19: #{pallas_graph_mlp.1} parent=0 // pred_check_branch
    %19 = sbr.rel (0) target = $region21
  $region20: #{pallas_graph_mlp.1} parent=0 // pred_region
    _
  $region21: #{pallas_graph_mlp.1} parent=0 // pred_fallthru
    _
  %v21 = vld [vmem:[%s2] sm:$0x7]
  %v22 = vld [vmem:[%s0] sm:$0xf]
  %v23 = vld [vmem:[%s0 + $0x4] sm:$0xf]
  %v24 = vld [vmem:[%s0 + $0x8] sm:$0xf]
  %v25 = vld [vmem:[%s0 + $0xc] sm:$0xf]
  %v26 = vld [vmem:[%s0 + $0x10] sm:$0xf]
  %v27 = vld [vmem:[%s0 + $0x14] sm:$0xf]
  %v28 = vld [vmem:[%s0 + $0x18] sm:$0xf]
  %v29 = vld [vmem:[%s0 + $0x1c] sm:$0xf]
  %v30 = vld [vmem:[%s1] sm:$0xf]
  %v31 = vlaneseq
  %v32 = vshrl.u32 %v31, 7
  %v33 = vsub.s32 0, %v32
  %v34 = vrot.slane %v21, %v33
  %v43 = vunpack.c.l.b16 %v22
  %v44 = vunpack.c.l.b16 %v23
  %v45 = vunpack.c.l.b16 %v24
  %v46 = vunpack.c.l.b16 %v25
  %v47 = vunpack.c.l.b16 %v26
  %v48 = vunpack.c.l.b16 %v27
  %v49 = vunpack.c.l.b16 %v28
  %v50 = vunpack.c.l.b16 %v29
  %v51 = vpack.c.b16 %v44, %v43
  %v52 = vpack.c.b16 %v46, %v45
  %v53 = vpack.c.b16 %v48, %v47
  %v54 = vpack.c.b16 %v50, %v49
  %vm55 = vcmask 64512
  %v57 = vsel %vm55, %v51, 0
  %v60 = vsel %vm55, %v52, 0
  %v63 = vsel %vm55, %v53, 0
  %v66 = vsel %vm55, %v54, 0
  %vm68 = vcmask 1043456
  %v70 = vsel %vm68, %v30, 0
  %72 = vmatprep.subr.bf16.mxu0 0
  %73 = vmatpush1.bf16.msra.mxu0 %v70
  %74 = vmatprep.subr.bf16.mxu0 0
  %75 = vmatpush1.bf16.msra.mxu0 0
  %76 = vmatprep.subr.bf16.mxu0 0
  %77 = vmatpush1.bf16.msra.mxu0 0
  %78 = vmatprep.subr.bf16.mxu0 0
  %79 = vmatpush1.bf16.msra.mxu0 0
  %80 = vmatprep.subr.bf16.mxu0 0
  %81 = vmatpush1.bf16.msra.mxu0 0
  %82 = vmatprep.subr.bf16.mxu0 0
  %83 = vmatpush1.bf16.msra.mxu0 0
  %84 = vmatprep.subr.bf16.mxu0 0
  %85 = vmatpush1.bf16.msra.mxu0 0
  %86 = vmatprep.subr.bf16.mxu0 0
  %87 = vmatpush1.bf16.msra.mxu0 0
  %88 = vmatprep.subr.bf16.mxu0 0
  %89 = vmatpush1.bf16.msra.mxu0 0
  %90 = vmatprep.subr.bf16.mxu0 0
  %91 = vmatpush1.bf16.msra.mxu0 0
  %92 = vmatprep.subr.bf16.mxu0 0
  %93 = vmatpush1.bf16.msra.mxu0 0
  %94 = vmatprep.subr.bf16.mxu0 0
  %95 = vmatpush1.bf16.msra.mxu0 0
  %96 = vmatprep.subr.bf16.mxu0 0
  %97 = vmatpush1.bf16.msra.mxu0 0
  %98 = vmatprep.subr.bf16.mxu0 0
  %99 = vmatpush1.bf16.msra.mxu0 0
  %100 = vmatprep.subr.bf16.mxu0 0
  %101 = vmatpush1.bf16.msra.mxu0 0
  %102 = vmatprep.subr.bf16.mxu0 0
  %103 = vmatpush1.bf16.msra.mxu0 0
  %104 = vmatprep.mubr.bf16.mxu0 0
  %105 = vmatmul.mubr.bf16.gmra.mrb[0].mxu0 %v57
  %v106 = vpop.f32.mrb[0].mxu0
  %v107 = vadd.f32 %v34, %v106
  %v108 = vpop.f32.mrb[0].mxu0
  %v109 = vpop.f32.mrb[0].mxu0
  %v110 = vadd.f32 %v34, %v109
  %v111 = vpop.f32.mrb[0].mxu0
  %112 = vmatprep.mubr.bf16.mxu0 0
  %113 = vmatmul.mubr.bf16.gmra.mrb[0].mxu0 %v60
  %v114 = vpop.f32.mrb[0].mxu0
  %v115 = vadd.f32 %v34, %v114
  %v116 = vpop.f32.mrb[0].mxu0
  %v117 = vpop.f32.mrb[0].mxu0
  %v118 = vadd.f32 %v34, %v117
  %v119 = vpop.f32.mrb[0].mxu0
  %120 = vmatprep.mubr.bf16.mxu0 0
  %121 = vmatmul.mubr.bf16.gmra.mrb[0].mxu0 %v63
  %v122 = vpop.f32.mrb[0].mxu0
  %v123 = vadd.f32 %v34, %v122
  %v124 = vpop.f32.mrb[0].mxu0
  %v125 = vpop.f32.mrb[0].mxu0
  %v126 = vadd.f32 %v34, %v125
  %v127 = vpop.f32.mrb[0].mxu0
  %128 = vmatprep.mubr.bf16.mxu0 0
  %129 = vmatmul.mubr.bf16.gmra.mrb[0].mxu0 %v66
  %v130 = vpop.f32.mrb[0].mxu0
  %v131 = vadd.f32 %v34, %v130
  %v132 = vpop.f32.mrb[0].mxu0
  %v133 = vpop.f32.mrb[0].mxu0
  %v134 = vadd.f32 %v34, %v133
  %v135 = vpop.f32.mrb[0].mxu0
  %136 = vdwg.mxu0
  %v137 = vmul.f32 %v107, 0.01
  %v138 = vmul.f32 %v110, 0.01
  %v139 = vmul.f32 %v115, 0.01
  %v140 = vmul.f32 %v118, 0.01
  %v141 = vmul.f32 %v123, 0.01
  %v142 = vmul.f32 %v126, 0.01
  %v143 = vmul.f32 %v131, 0.01
  %v144 = vmul.f32 %v134, 0.01
  %v145 = vmax.f32 %v107, %v137
  %v146 = vmax.f32 %v110, %v138
  %v147 = vmax.f32 %v115, %v139
  %v148 = vmax.f32 %v118, %v140
  %v149 = vmax.f32 %v123, %v141
  %v150 = vmax.f32 %v126, %v142
  %v151 = vmax.f32 %v131, %v143
  %v152 = vmax.f32 %v134, %v144
  %153 = vadd.xlane.f32.xlu0 %v145
  %v154 = vpop.xlane.xlu0 %153
  %155 = vadd.xlane.f32.xlu0 %v146
  %v156 = vpop.xlane.xlu0 %155
  %157 = vadd.xlane.f32.xlu0 %v147
  %v158 = vpop.xlane.xlu0 %157
  %159 = vadd.xlane.f32.xlu0 %v148
  %v160 = vpop.xlane.xlu0 %159
  %161 = vadd.xlane.f32.xlu0 %v149
  %v162 = vpop.xlane.xlu0 %161
  %163 = vadd.xlane.f32.xlu0 %v150
  %v164 = vpop.xlane.xlu0 %163
  %165 = vadd.xlane.f32.xlu0 %v151
  %v166 = vpop.xlane.xlu0 %165
  %167 = vadd.xlane.f32.xlu0 %v152
  %v168 = vpop.xlane.xlu0 %167
  %v169 = vmul.f32 %v145, %v145
  %v170 = vmul.f32 %v146, %v146
  %v171 = vmul.f32 %v147, %v147
  %v172 = vmul.f32 %v148, %v148
  %v173 = vmul.f32 %v149, %v149
  %v174 = vmul.f32 %v150, %v150
  %v175 = vmul.f32 %v151, %v151
  %v176 = vmul.f32 %v152, %v152
  %177 = vadd.xlane.f32.xlu0 %v169
  %v178 = vpop.xlane.xlu0 %177
  %179 = vadd.xlane.f32.xlu0 %v170
  %v180 = vpop.xlane.xlu0 %179
  %181 = vadd.xlane.f32.xlu0 %v171
  %v182 = vpop.xlane.xlu0 %181
  %183 = vadd.xlane.f32.xlu0 %v172
  %v184 = vpop.xlane.xlu0 %183
  %185 = vadd.xlane.f32.xlu0 %v173
  %v186 = vpop.xlane.xlu0 %185
  %187 = vadd.xlane.f32.xlu0 %v174
  %v188 = vpop.xlane.xlu0 %187
  %189 = vadd.xlane.f32.xlu0 %v175
  %v190 = vpop.xlane.xlu0 %189
  %191 = vadd.xlane.f32.xlu0 %v176
  %v192 = vpop.xlane.xlu0 %191
  %v193 = vmul.f32 %v154, 0.03125
  %v194 = vmul.f32 %v156, 0.03125
  %v195 = vmul.f32 %v158, 0.03125
  %v196 = vmul.f32 %v160, 0.03125
  %v197 = vmul.f32 %v162, 0.03125
  %v198 = vmul.f32 %v164, 0.03125
  %v199 = vmul.f32 %v166, 0.03125
  %v200 = vmul.f32 %v168, 0.03125
  %v201 = vmul.f32 %v178, 0.03125
  %v202 = vmul.f32 %v180, 0.03125
  %v203 = vmul.f32 %v182, 0.03125
  %v204 = vmul.f32 %v184, 0.03125
  %v205 = vmul.f32 %v186, 0.03125
  %v206 = vmul.f32 %v188, 0.03125
  %v207 = vmul.f32 %v190, 0.03125
  %v208 = vmul.f32 %v192, 0.03125
  %v209 = vmul.f32 %v193, %v193
  %v210 = vmul.f32 %v194, %v194
  %v211 = vmul.f32 %v195, %v195
  %v212 = vmul.f32 %v196, %v196
  %v213 = vmul.f32 %v197, %v197
  %v214 = vmul.f32 %v198, %v198
  %v215 = vmul.f32 %v199, %v199
  %v216 = vmul.f32 %v200, %v200
  %v217 = vsub.f32 %v201, %v209
  %v218 = vsub.f32 %v202, %v210
  %v219 = vsub.f32 %v203, %v211
  %v220 = vsub.f32 %v204, %v212
  %v221 = vsub.f32 %v205, %v213
  %v222 = vsub.f32 %v206, %v214
  %v223 = vsub.f32 %v207, %v215
  %v224 = vsub.f32 %v208, %v216
  %v225 = vsub.f32 %v145, %v193
  %v226 = vsub.f32 %v146, %v194
  %v227 = vsub.f32 %v147, %v195
  %v228 = vsub.f32 %v148, %v196
  %v229 = vsub.f32 %v149, %v197
  %v230 = vsub.f32 %v150, %v198
  %v231 = vsub.f32 %v151, %v199
  %v232 = vsub.f32 %v152, %v200
  %v233 = vadd.f32 %v217, 1e-05
  %v234 = vadd.f32 %v218, 1e-05
  %v235 = vadd.f32 %v219, 1e-05
  %v236 = vadd.f32 %v220, 1e-05
  %v237 = vadd.f32 %v221, 1e-05
  %v238 = vadd.f32 %v222, 1e-05
  %v239 = vadd.f32 %v223, 1e-05
  %v240 = vadd.f32 %v224, 1e-05
  %v241 = vrsqrt.pop %v233
  %v242 = vrsqrt.pop %v234
  %v243 = vrsqrt.pop %v235
  %v244 = vrsqrt.pop %v236
  %v245 = vrsqrt.pop %v237
  %v246 = vrsqrt.pop %v238
  %v247 = vrsqrt.pop %v239
  %v248 = vrsqrt.pop %v240
  %v249 = vmul.f32 %v225, %v241
  %v250 = vmul.f32 %v226, %v242
  %v251 = vmul.f32 %v227, %v243
  %v252 = vmul.f32 %v228, %v244
  %v253 = vmul.f32 %v229, %v245
  %v254 = vmul.f32 %v230, %v246
  %v255 = vmul.f32 %v231, %v247
  %v256 = vmul.f32 %v232, %v248
  %v257 = vlaneseq
  %v258 = vshrl.u32 %v257, 7
  %v259 = vsub.s32 1, %v258
  %v260 = vrot.slane %v21, %v259
  %v261 = vmul.f32 %v249, %v260
  %v262 = vmul.f32 %v250, %v260
  %v263 = vmul.f32 %v251, %v260
  %v264 = vmul.f32 %v252, %v260
  %v265 = vmul.f32 %v253, %v260
  %v266 = vmul.f32 %v254, %v260
  %v267 = vmul.f32 %v255, %v260
  %v268 = vmul.f32 %v256, %v260
  %v269 = vlaneseq
  %v270 = vshrl.u32 %v269, 7
  %v271 = vsub.s32 2, %v270
  %v272 = vrot.slane %v21, %v271
  %v273 = vadd.f32 %v261, %v272
  %v274 = vadd.f32 %v262, %v272
  %v275 = vadd.f32 %v263, %v272
  %v276 = vadd.f32 %v264, %v272
  %v277 = vadd.f32 %v265, %v272
  %v278 = vadd.f32 %v266, %v272
  %v279 = vadd.f32 %v267, %v272
  %v280 = vadd.f32 %v268, %v272
  %v281 = vpack.c.bf16 %v274, %v273
  %v282 = vpack.c.bf16 %v276, %v275
  %v283 = vpack.c.bf16 %v278, %v277
  %v284 = vpack.c.bf16 %v280, %v279
  %v285 = vld [vmem:[%s3] sm:$0xf]
  %v286 = vld [vmem:[%s3 + $0x4] sm:$0xf]
  %v287 = vld [vmem:[%s3 + $0x8] sm:$0xf]
  %v288 = vld [vmem:[%s3 + $0xc] sm:$0xf]
  %v289 = vld [vmem:[%s3 + $0x10] sm:$0xf]
  %v290 = vld [vmem:[%s3 + $0x14] sm:$0xf]
  %v291 = vld [vmem:[%s3 + $0x18] sm:$0xf]
  %v292 = vld [vmem:[%s3 + $0x1c] sm:$0xf]
  %v293 = vld [vmem:[%s3 + $0x20] sm:$0xf]
  %v294 = vld [vmem:[%s3 + $0x24] sm:$0xf]
  %v295 = vld [vmem:[%s3 + $0x28] sm:$0xf]
  %v296 = vld [vmem:[%s3 + $0x2c] sm:$0xf]
  %v297 = vld [vmem:[%s3 + $0x30] sm:$0xf]
  %v298 = vld [vmem:[%s3 + $0x34] sm:$0xf]
  %v299 = vld [vmem:[%s3 + $0x38] sm:$0xf]
  %v300 = vld [vmem:[%s3 + $0x3c] sm:$0xf]
  %v301 = vld [vmem:[%s4] sm:$0x1]
  %v303 = vlaneseq
  %v304 = vshrl.u32 %v303, 7
  %v305 = vsub.s32 0, %v304
  %v306 = vrot.slane %v301, %v305
  %v324 = vunpack.c.l.b16 %v285
  %v325 = vunpack.c.l.b16 %v286
  %v326 = vunpack.c.l.b16 %v287
  %v327 = vunpack.c.l.b16 %v288
  %v328 = vunpack.c.l.b16 %v289
  %v329 = vunpack.c.l.b16 %v290
  %v330 = vunpack.c.l.b16 %v291
  %v331 = vunpack.c.l.b16 %v292
  %v332 = vunpack.c.l.b16 %v293
  %v333 = vunpack.c.l.b16 %v294
  %v334 = vunpack.c.l.b16 %v295
  %v335 = vunpack.c.l.b16 %v296
  %v336 = vunpack.c.l.b16 %v297
  %v337 = vunpack.c.l.b16 %v298
  %v338 = vunpack.c.l.b16 %v299
  %v339 = vunpack.c.l.b16 %v300
  %v340 = vpack.c.b16 %v325, %v324
  %v341 = vpack.c.b16 %v327, %v326
  %v342 = vpack.c.b16 %v329, %v328
  %v343 = vpack.c.b16 %v331, %v330
  %v344 = vpack.c.b16 %v333, %v332
  %v345 = vpack.c.b16 %v335, %v334
  %v346 = vpack.c.b16 %v337, %v336
  %v347 = vpack.c.b16 %v339, %v338
  %356 = vmatprep.subr.bf16.mxu0 0
  %357 = vmatpush1.bf16.msra.mxu0 %v340
  %358 = vmatprep.subr.bf16.mxu0 0
  %359 = vmatpush1.bf16.msra.mxu0 %v341
  %360 = vmatprep.subr.bf16.mxu0 0
  %361 = vmatpush1.bf16.msra.mxu0 %v342
  %362 = vmatprep.subr.bf16.mxu0 0
  %363 = vmatpush1.bf16.msra.mxu0 %v343
  %364 = vmatprep.subr.bf16.mxu0 0
  %365 = vmatpush1.bf16.msra.mxu0 %v344
  %366 = vmatprep.subr.bf16.mxu0 0
  %367 = vmatpush1.bf16.msra.mxu0 %v345
  %368 = vmatprep.subr.bf16.mxu0 0
  %369 = vmatpush1.bf16.msra.mxu0 %v346
  %370 = vmatprep.subr.bf16.mxu0 0
  %371 = vmatpush1.bf16.msra.mxu0 %v347
  %372 = vmatprep.subr.bf16.mxu0 0
  %373 = vmatpush1.bf16.msra.mxu0 0
  %374 = vmatprep.subr.bf16.mxu0 0
  %375 = vmatpush1.bf16.msra.mxu0 0
  %376 = vmatprep.subr.bf16.mxu0 0
  %377 = vmatpush1.bf16.msra.mxu0 0
  %378 = vmatprep.subr.bf16.mxu0 0
  %379 = vmatpush1.bf16.msra.mxu0 0
  %380 = vmatprep.subr.bf16.mxu0 0
  %381 = vmatpush1.bf16.msra.mxu0 0
  %382 = vmatprep.subr.bf16.mxu0 0
  %383 = vmatpush1.bf16.msra.mxu0 0
  %384 = vmatprep.subr.bf16.mxu0 0
  %385 = vmatpush1.bf16.msra.mxu0 0
  %386 = vmatprep.subr.bf16.mxu0 0
  %387 = vmatpush1.bf16.msra.mxu0 0
  %388 = vmatprep.mubr.bf16.mxu0 0
  %389 = vmatmul.mubr.bf16.gmra.mrb[0].mxu0 %v281
  %v390 = vpop.f32.mrb[0].mxu0
  %v391 = vadd.f32 %v306, %v390
  %v392 = vpop.f32.mrb[0].mxu0
  %v393 = vpop.f32.mrb[0].mxu0
  %v394 = vadd.f32 %v306, %v393
  %v395 = vpop.f32.mrb[0].mxu0
  %396 = vmatprep.mubr.bf16.mxu0 0
  %397 = vmatmul.mubr.bf16.gmra.mrb[0].mxu0 %v282
  %v398 = vpop.f32.mrb[0].mxu0
  %v399 = vadd.f32 %v306, %v398
  %v400 = vpop.f32.mrb[0].mxu0
  %v401 = vpop.f32.mrb[0].mxu0
  %v402 = vadd.f32 %v306, %v401
  %v403 = vpop.f32.mrb[0].mxu0
  %404 = vmatprep.mubr.bf16.mxu0 0
  %405 = vmatmul.mubr.bf16.gmra.mrb[0].mxu0 %v283
  %v406 = vpop.f32.mrb[0].mxu0
  %v407 = vadd.f32 %v306, %v406
  %v408 = vpop.f32.mrb[0].mxu0
  %v409 = vpop.f32.mrb[0].mxu0
  %v410 = vadd.f32 %v306, %v409
  %v411 = vpop.f32.mrb[0].mxu0
  %412 = vmatprep.mubr.bf16.mxu0 0
  %413 = vmatmul.mubr.bf16.gmra.mrb[0].mxu0 %v284
  %v414 = vpop.f32.mrb[0].mxu0
  %v415 = vadd.f32 %v306, %v414
  %v416 = vpop.f32.mrb[0].mxu0
  %v417 = vpop.f32.mrb[0].mxu0
  %v418 = vadd.f32 %v306, %v417
  %v419 = vpop.f32.mrb[0].mxu0
  %420 = vdwg.mxu0
  %421 = vst [vmem:[%s5] sm:$0xff] %v391
  %422 = vst [vmem:[%s5 + $0x8] sm:$0xff] %v394
  %423 = vst [vmem:[%s5 + $0x10] sm:$0xff] %v399
  %424 = vst [vmem:[%s5 + $0x18] sm:$0xff] %v402
  %425 = vst [vmem:[%s5 + $0x20] sm:$0xff] %v407
  %426 = vst [vmem:[%s5 + $0x28] sm:$0xff] %v410
  %427 = vst [vmem:[%s5 + $0x30] sm:$0xff] %v415
  %428 = vst [vmem:[%s5 + $0x38] sm:$0xff] %v418
  // Predicated region
  $region22: #{pallas_graph_mlp.1} parent=0 // pred_check
    _
  $region23: #{pallas_graph_mlp.1} parent=0 // pred_check_branch
    %430 = sbr.rel (0) target = $region25
  $region24: #{pallas_graph_mlp.1} parent=0 // pred_region
    _
  $region25: #{pallas_graph_mlp.1} parent=0 // pred_fallthru
    _
  // Predicated region
  $region26: #{pallas_graph_mlp.1} parent=0 // pred_check
    _
  $region27: #{pallas_graph_mlp.1} parent=0 // pred_check_branch
    %432 = sbr.rel (0) target = $region29
  $region28: #{pallas_graph_mlp.1} parent=0 // pred_region
    _
  $region29: #{pallas_graph_mlp.1} parent=0 // pred_fallthru
    _

</llo_original>
